<compile_context>
chip_gen: v6e
topology: v6e:2x2x1
jax: 0.10.0
libtpu: 0.0.40
codegen_flags: <defaults>
</compile_context>

<pallas_src>
import math
import functools

import jax
import jax.numpy as jnp
from jax import lax
from jax.experimental import pallas as pl
from jax.experimental.pallas import tpu as pltpu


_INV_SQRT2 = 0.7071067811865476       # 1/sqrt(2): multiply instead of divide
_SQRT_2_OVER_PI = 0.7978845608028654


def _gelu(x, approx):
    if approx:
        # tanh approximation -> routed to the EUP (use only if VALU-bound and
        # the accuracy deviation from PyTorch's erf GELU is signed off).
        return 0.5 * x * (1.0 + jnp.tanh(_SQRT_2_OVER_PI * (x + 0.044715 * x * x * x)))
    # nn.GELU default = exact (erf-based) GELU; computed in f32.
    return 0.5 * x * (1.0 + lax.erf(x * jnp.float32(_INV_SQRT2)))


def _mlp_kernel(x_ref, w1_ref, b1_ref, w2_ref, b2_ref, o_ref, *,
                num_chunks, compute_dtype, approx_gelu):
    # x_ref:  (Cin, ts)                  spatial tile (lane dim = spatial)
    # w1_ref: (num_chunks, chunk, Cin)   fc1 weight, natural (out, in) orientation
    # b1_ref: (num_chunks, chunk, 1)
    # w2_ref: (num_chunks, Cout, chunk)  fc2 weight
    # b2_ref: (Cout, 1)
    # o_ref:  (Cout, ts)
    x = x_ref[...].astype(compute_dtype)   # in-kernel cast -> MXU-native bf16 path

    def chunk_out(c):
        h = jnp.dot(w1_ref[c], x, preferred_element_type=jnp.float32)
        h = _gelu(h + b1_ref[c].astype(jnp.float32), approx_gelu)
        # TODO(synk): dropout (drop_rate > 0) not implemented; module default 0.0 -> identity.
        return jnp.dot(w2_ref[c], h.astype(compute_dtype),
                       preferred_element_type=jnp.float32)

    if num_chunks == 1:
        y = chunk_out(0)
    else:
        # fori_loop (not unrolled) bounds the live range of each (chunk, ts) f32
        # intermediate -> VMEM stays ~chunk*ts*4 instead of Hid*ts*4.
        y = lax.fori_loop(0, num_chunks,
                          lambda c, acc: acc + chunk_out(c),
                          jnp.zeros(o_ref.shape, jnp.float32))

    o_ref[...] = (y + b2_ref[...].astype(jnp.float32)).astype(o_ref.dtype)


def _const_spec(block_shape, single_buffer):
    """BlockSpec with a constant index map; single-buffered when supported."""
    zeros = (0,) * len(block_shape)
    index_map = lambda n, s, _z=zeros: _z
    if single_buffer:
        try:
            return pl.BlockSpec(block_shape, index_map, pipeline_mode=pl.Buffered(1))
        except Exception:  # pl.Buffered / pipeline_mode unavailable -> default buffering
            pass
    return pl.BlockSpec(block_shape, index_map)


def distributed_mlp_forward(x_nchw, w1, b1, w2, b2, *,
                            tile_spatial=2048,
                            hidden_chunk=512,
                            compute_dtype=jnp.bfloat16,
                            approx_gelu=False,
                            single_buffer_weights=True):
    """x_nchw: (N, Cin, H, W); w1: (Hid, Cin); w2: (Cout, Hid). Returns (N, Cout, H, W)."""
    N, Cin, H, W = x_nchw.shape
    Hid = w1.shape[0]
    Cout = w2.shape[0]
    HW = H * W

    # NCHW-native: no HBM transposes, just a metadata reshape to (N, Cin, H*W).
    x_flat = x_nchw.reshape(N, Cin, HW)

    # Hidden-dim chunking (caps the (chunk, ts) f32 intermediate; crucial on v7x).
    if Hid > hidden_chunk and Hid % hidden_chunk == 0:
        chunk = hidden_chunk
    else:
        chunk = Hid
    num_chunks = Hid // chunk

    # Spatial (lane) tile: large, multiple of 128 (or == HW for small images);
    # cdiv grid + Pallas OOB masking handles a ragged tail.
    ts = HW if HW <= tile_spatial else tile_spatial
    num_s = pl.cdiv(HW, ts)
    # v7x has 2 TensorCores: make sure the parallel grid has >= 2 programs.
    if N * num_s < 2 and HW >= 256:
        ts = (((HW + 1) // 2) + 127) // 128 * 128
        num_s = pl.cdiv(HW, ts)

    x_size = jnp.dtype(x_nchw.dtype).itemsize
    w_size = jnp.dtype(compute_dtype).itemsize
    out_dtype = x_nchw.dtype
    o_size = jnp.dtype(out_dtype).itemsize

    # Generation-aware VMEM budget (v5e/v6e: 128 MiB, v7x: 64 MiB per TensorCore).
    try:
        vmem_cap = int(pltpu.get_tpu_info().vmem_capacity_bytes)
    except Exception:
        vmem_cap = 64 * 1024 * 1024
    budget = int(0.75 * vmem_cap)

    wgt_bytes = (Hid * Cin + Cout * Hid) * w_size + (Hid + Cout) * 4
    if not single_buffer_weights:
        wgt_bytes *= 2  # fallback path double-buffers the resident weights

    def vmem_need(ts_):
        act = 2 * Cin * ts_ * x_size + 2 * Cout * ts_ * o_size   # double-buffered tiles
        mid = chunk * ts_ * 4 + Cout * ts_ * 4                   # h chunk + f32 accumulator
        return int(1.25 * (act + mid + wgt_bytes)) + (4 << 20)   # padding / headroom

    # Shrink the spatial tile until the estimate fits the per-core budget.
    while vmem_need(ts) > budget and ts > 256:
        ts = max(256, ((ts // 2) + 127) // 128 * 128)
    num_s = pl.cdiv(HW, ts)
    vmem_limit = min(max(vmem_need(ts), 32 * 1024 * 1024), budget)

    # Weights reshaped per hidden chunk (one-time wrapper ops on small arrays);
    # compute dtype (default bf16) puts both matmuls on the MXU's native path and
    # halves resident weight VMEM.  Biases stay f32 (added after f32 accumulation).
    w1_r = w1.astype(compute_dtype).reshape(num_chunks, chunk, Cin)
    b1_r = b1.astype(jnp.float32).reshape(num_chunks, chunk, 1)
    w2_r = w2.astype(compute_dtype).reshape(Cout, num_chunks, chunk).transpose(1, 0, 2)
    b2_r = b2.astype(jnp.float32).reshape(Cout, 1)

    rows = N * HW
    cost = pl.CostEstimate(
        flops=2 * rows * (Cin * Hid + Hid * Cout),
        transcendentals=rows * Hid,
        bytes_accessed=rows * (Cin * x_size + Cout * o_size)
        + (Hid * Cin + Cout * Hid) * w_size + (Hid + Cout) * 4,
    )

    kernel = functools.partial(_mlp_kernel, num_chunks=num_chunks,
                               compute_dtype=compute_dtype, approx_gelu=approx_gelu)

    out = pl.pallas_call(
        kernel,
        out_shape=jax.ShapeDtypeStruct((N, Cout, HW), out_dtype),
        grid_spec=pltpu.PrefetchScalarGridSpec(
            num_scalar_prefetch=0,
            grid=(N, num_s),
            in_specs=[
                pl.BlockSpec((None, Cin, ts), lambda n, s: (n, 0, s)),
                _const_spec((num_chunks, chunk, Cin), single_buffer_weights),
                _const_spec((num_chunks, chunk, 1), single_buffer_weights),
                _const_spec((num_chunks, Cout, chunk), single_buffer_weights),
                _const_spec((Cout, 1), single_buffer_weights),
            ],
            out_specs=pl.BlockSpec((None, Cout, ts), lambda n, s: (n, 0, s)),
        ),
        compiler_params=pltpu.CompilerParams(
            dimension_semantics=("parallel", "parallel"),
            vmem_limit_bytes=vmem_limit,
        ),
        cost_estimate=cost,
    )(x_flat, w1_r, b1_r, w2_r, b2_r)

    return out.reshape(N, Cout, H, W)


def _reference_forward(x_nchw, w1, b1, w2, b2, compute_dtype=jnp.float32):
    # Pure-JAX reference mirroring F.conv2d with 1x1 kernels + bias + exact GELU.
    # compute_dtype quantizes operands the same way the kernel does (f32 = exact).
    cdt = compute_dtype
    x = jnp.transpose(x_nchw, (0, 2, 3, 1)).astype(cdt)          # NHWC
    h = jnp.einsum("nhwc,oc->nhwo", x, w1.astype(cdt),
                   preferred_element_type=jnp.float32) + b1.reshape(1, 1, 1, -1)
    h = 0.5 * h * (1.0 + lax.erf(h / jnp.sqrt(2.0)))
    y = jnp.einsum("nhwc,oc->nhwo", h.astype(cdt), w2.astype(cdt),
                   preferred_element_type=jnp.float32) + b2.reshape(1, 1, 1, -1)
    return jnp.transpose(y, (0, 3, 1, 2)).astype(x_nchw.dtype)   # NCHW


if __name__ == "__main__":
    key = jax.random.PRNGKey(0)
    ks = jax.random.split(key, 8)

    def run(args, sbw, **kw):
        fwd = jax.jit(functools.partial(distributed_mlp_forward,
                                        single_buffer_weights=sbw, **kw))
        return jax.block_until_ready(fwd(*args))

    # ---- Config A: module-faithful small shapes, default bf16 compute. ----
    N, Cin, Himg, Wimg = 2, 4, 16, 16
    hidden_features, out_features, gain = 32, 4, 1.0

    x = jax.random.normal(ks[0], (N, Cin, Himg, Wimg), dtype=jnp.float32)
    # fc1: weight (hidden, in, 1, 1) ~ N(0, sqrt(2/in_features)), bias = 0
    w1 = math.sqrt(2.0 / Cin) * jax.random.normal(
        ks[1], (hidden_features, Cin), dtype=jnp.float32)
    b1 = jnp.zeros((hidden_features,), dtype=jnp.float32)
    # fc2: weight (out, hidden, 1, 1) ~ N(0, sqrt(gain/hidden)), bias = 0
    w2 = math.sqrt(gain / hidden_features) * jax.random.normal(
        ks[2], (out_features, hidden_features), dtype=jnp.float32)
    b2 = jnp.zeros((out_features,), dtype=jnp.float32)
    args_a = (x, w1, b1, w2, b2)

    single_buffer = True
    try:
        y = run(args_a, True)
    except Exception:
        # This JAX build rejects pipeline_mode=pl.Buffered(1) -> default buffering.
        single_buffer = False
        y = run(args_a, False)

    y_ref_q = _reference_forward(*args_a, compute_dtype=jnp.bfloat16)
    assert y.shape == (N, out_features, Himg, Wimg)
    assert jnp.allclose(y, y_ref_q, atol=1e-2, rtol=1e-2)

    # ---- Config B: ragged spatial tail + hidden chunking, exact f32 compute. ----
    Nb, Cb, Hb, Wb = 1, 4, 16, 20          # HW=320, ts=256 -> ragged 64-lane tail
    Hidb, Coutb = 32, 4
    xb = jax.random.normal(ks[3], (Nb, Cb, Hb, Wb), dtype=jnp.float32)
    w1b = math.sqrt(2.0 / Cb) * jax.random.normal(ks[4], (Hidb, Cb), jnp.float32)
    b1b = 0.1 * jax.random.normal(ks[5], (Hidb,), jnp.float32)
    w2b = math.sqrt(1.0 / Hidb) * jax.random.normal(ks[6], (Coutb, Hidb), jnp.float32)
    b2b = 0.1 * jax.random.normal(ks[7], (Coutb,), jnp.float32)
    args_b = (xb, w1b, b1b, w2b, b2b)

    yb = run(args_b, single_buffer, tile_spatial=256, hidden_chunk=16,
             compute_dtype=jnp.float32)
    yb_ref = _reference_forward(*args_b, compute_dtype=jnp.float32)
    assert yb.shape == (Nb, Coutb, Hb, Wb)
    assert jnp.allclose(yb, yb_ref, atol=1e-4, rtol=1e-4)

    print("KERNEL_OK")
</pallas_src>

<mosaic_0001>
module attributes {stable_mosaic.version = 11 : i64} {
  func.func @_mlp_kernel(%arg0: i32, %arg1: i32, %arg2: memref<1x4x256xf32, #tpu.memory_space<vmem>>, %arg3: memref<1x32x4xbf16, #tpu.memory_space<vmem>>, %arg4: memref<1x32x1xf32, #tpu.memory_space<vmem>>, %arg5: memref<1x4x32xbf16, #tpu.memory_space<vmem>>, %arg6: memref<4x1xf32, #tpu.memory_space<vmem>>, %arg7: memref<1x4x256xf32, #tpu.memory_space<vmem>>) attributes {dimension_semantics = [#tpu.dimension_semantics<parallel>, #tpu.dimension_semantics<parallel>], iteration_bounds = array<i64: 2, 1>, scalar_prefetch = 0 : i64, scratch_operands = 0 : i64, tpu.core_type = #tpu.core_type<tc>, window_params = [{transform_indices = @transform_0, window_bounds = array<i64: 1, 4, 256>}, {pipeline_mode = #tpu.pipeline_mode<synchronous>, transform_indices = @transform_1, window_bounds = array<i64: 1, 32, 4>}, {pipeline_mode = #tpu.pipeline_mode<synchronous>, transform_indices = @transform_2, window_bounds = array<i64: 1, 32, 1>}, {pipeline_mode = #tpu.pipeline_mode<synchronous>, transform_indices = @transform_3, window_bounds = array<i64: 1, 4, 32>}, {pipeline_mode = #tpu.pipeline_mode<synchronous>, transform_indices = @transform_4, window_bounds = array<i64: 4, 1>}, {transform_indices = @transform_5, window_bounds = array<i64: 1, 4, 256>}]} {
    %c0 = arith.constant 0 : index
    %c0_0 = arith.constant 0 : index
    %c0_1 = arith.constant 0 : index
    %0 = vector.load %arg2[%c0, %c0_0, %c0_1] : memref<1x4x256xf32, #tpu.memory_space<vmem>>, vector<1x4x256xf32>
    %1 = vector.shape_cast %0 : vector<1x4x256xf32> to vector<4x256xf32>
    %2 = arith.truncf %1 : vector<4x256xf32> to vector<4x256xbf16>
    %c0_2 = arith.constant 0 : index
    %c0_3 = arith.constant 0 : index
    %c0_4 = arith.constant 0 : index
    %3 = vector.load %arg3[%c0_2, %c0_3, %c0_4] : memref<1x32x4xbf16, #tpu.memory_space<vmem>>, vector<1x32x4xbf16>
    %4 = vector.shape_cast %3 : vector<1x32x4xbf16> to vector<32x4xbf16>
    %cst = arith.constant dense<0.000000e+00> : vector<32x256xf32>
    %5 = tpu.matmul %4, %2, %cst {dimension_numbers = #tpu.dot_dimension_numbers<[1], [0], [0], [1], [0, 0, 1, 1], [], []>} : vector<32x4xbf16>, vector<4x256xbf16>, vector<32x256xf32> -> vector<32x256xf32>
    %c0_5 = arith.constant 0 : index
    %c0_6 = arith.constant 0 : index
    %c0_7 = arith.constant 0 : index
    %6 = vector.load %arg4[%c0_5, %c0_6, %c0_7] : memref<1x32x1xf32, #tpu.memory_space<vmem>>, vector<1x32x1xf32>
    %7 = vector.shape_cast %6 : vector<1x32x1xf32> to vector<32x1xf32>
    %8 = vector.broadcast %7 : vector<32x1xf32> to vector<32x256xf32>
    %9 = arith.addf %5, %8 : vector<32x256xf32>
    %cst_8 = arith.constant 5.000000e-01 : f32
    %10 = vector.broadcast %cst_8 : f32 to vector<32x256xf32>
    %11 = arith.mulf %10, %9 : vector<32x256xf32>
    %cst_9 = arith.constant 0.707106769 : f32
    %12 = vector.broadcast %cst_9 : f32 to vector<32x256xf32>
    %13 = arith.mulf %9, %12 : vector<32x256xf32>
    %14 = math.erf %13 : vector<32x256xf32>
    %cst_10 = arith.constant 1.000000e+00 : f32
    %15 = vector.broadcast %cst_10 : f32 to vector<32x256xf32>
    %16 = arith.addf %15, %14 : vector<32x256xf32>
    %17 = arith.mulf %11, %16 : vector<32x256xf32>
    %c0_11 = arith.constant 0 : index
    %c0_12 = arith.constant 0 : index
    %c0_13 = arith.constant 0 : index
    %18 = vector.load %arg5[%c0_11, %c0_12, %c0_13] : memref<1x4x32xbf16, #tpu.memory_space<vmem>>, vector<1x4x32xbf16>
    %19 = vector.shape_cast %18 : vector<1x4x32xbf16> to vector<4x32xbf16>
    %20 = arith.truncf %17 : vector<32x256xf32> to vector<32x256xbf16>
    %cst_14 = arith.constant dense<0.000000e+00> : vector<4x256xf32>
    %21 = tpu.matmul %19, %20, %cst_14 {dimension_numbers = #tpu.dot_dimension_numbers<[1], [0], [0], [1], [0, 0, 1, 1], [], []>} : vector<4x32xbf16>, vector<32x256xbf16>, vector<4x256xf32> -> vector<4x256xf32>
    %c0_15 = arith.constant 0 : index
    %c0_16 = arith.constant 0 : index
    %22 = vector.load %arg6[%c0_15, %c0_16] : memref<4x1xf32, #tpu.memory_space<vmem>>, vector<4x1xf32>
    %23 = vector.broadcast %22 : vector<4x1xf32> to vector<4x256xf32>
    %24 = arith.addf %21, %23 : vector<4x256xf32>
    %c0_17 = arith.constant 0 : index
    %c0_18 = arith.constant 0 : index
    %c0_19 = arith.constant 0 : index
    %25 = vector.load %arg7[%c0_17, %c0_18, %c0_19] : memref<1x4x256xf32, #tpu.memory_space<vmem>>, vector<1x4x256xf32>
    %26 = vector.shape_cast %25 : vector<1x4x256xf32> to vector<4x256xf32>
    %27 = vector.shape_cast %24 : vector<4x256xf32> to vector<1x4x256xf32>
    tpu.vector_store %arg7[%c0_17, %c0_18, %c0_19], %27 {strides = array<i32>} : memref<1x4x256xf32, #tpu.memory_space<vmem>>, vector<1x4x256xf32>,
    return
  }
  func.func @transform_0(%arg0: i32, %arg1: i32) -> (i32, i32, i32) {
    %c0_i32 = arith.constant 0 : i32
    %c0_i32_0 = arith.constant 0 : i32
    return %arg0, %c0_i32, %arg1 : i32, i32, i32
  }
  func.func @transform_1(%arg0: i32, %arg1: i32) -> (i32, i32, i32) {
    %c0_i32 = arith.constant 0 : i32
    %c0_i32_0 = arith.constant 0 : i32
    %c0_i32_1 = arith.constant 0 : i32
    %c0_i32_2 = arith.constant 0 : i32
    return %c0_i32, %c0_i32_0, %c0_i32_1 : i32, i32, i32
  }
  func.func @transform_2(%arg0: i32, %arg1: i32) -> (i32, i32, i32) {
    %c0_i32 = arith.constant 0 : i32
    %c0_i32_0 = arith.constant 0 : i32
    %c0_i32_1 = arith.constant 0 : i32
    %c0_i32_2 = arith.constant 0 : i32
    return %c0_i32, %c0_i32_0, %c0_i32_1 : i32, i32, i32
  }
  func.func @transform_3(%arg0: i32, %arg1: i32) -> (i32, i32, i32) {
    %c0_i32 = arith.constant 0 : i32
    %c0_i32_0 = arith.constant 0 : i32
    %c0_i32_1 = arith.constant 0 : i32
    %c0_i32_2 = arith.constant 0 : i32
    return %c0_i32, %c0_i32_0, %c0_i32_1 : i32, i32, i32
  }
  func.func @transform_4(%arg0: i32, %arg1: i32) -> (i32, i32) {
    %c0_i32 = arith.constant 0 : i32
    %c0_i32_0 = arith.constant 0 : i32
    %c0_i32_1 = arith.constant 0 : i32
    return %c0_i32, %c0_i32_0 : i32, i32
  }
  func.func @transform_5(%arg0: i32, %arg1: i32) -> (i32, i32, i32) {
    %c0_i32 = arith.constant 0 : i32
    %c0_i32_0 = arith.constant 0 : i32
    return %arg0, %c0_i32, %arg1 : i32, i32, i32
  }
}

module attributes {stable_mosaic.version = 11 : i64} {
  func.func @_mlp_kernel(%arg0: i32, %arg1: i32, %arg2: memref<1x4x256xf32, #tpu.memory_space<vmem>>, %arg3: memref<1x32x4xbf16, #tpu.memory_space<vmem>>, %arg4: memref<1x32x1xf32, #tpu.memory_space<vmem>>, %arg5: memref<1x4x32xbf16, #tpu.memory_space<vmem>>, %arg6: memref<4x1xf32, #tpu.memory_space<vmem>>, %arg7: memref<1x4x256xf32, #tpu.memory_space<vmem>>) attributes {dimension_semantics = [#tpu.dimension_semantics<parallel>, #tpu.dimension_semantics<parallel>], iteration_bounds = array<i64: 2, 1>, scalar_prefetch = 0 : i64, scratch_operands = 0 : i64, tpu.core_type = #tpu.core_type<tc>, window_params = [{transform_indices = @transform_0, window_bounds = array<i64: 1, 4, 256>}, {pipeline_mode = #tpu.pipeline_mode<synchronous>, transform_indices = @transform_1, window_bounds = array<i64: 1, 32, 4>}, {pipeline_mode = #tpu.pipeline_mode<synchronous>, transform_indices = @transform_2, window_bounds = array<i64: 1, 32, 1>}, {pipeline_mode = #tpu.pipeline_mode<synchronous>, transform_indices = @transform_3, window_bounds = array<i64: 1, 4, 32>}, {pipeline_mode = #tpu.pipeline_mode<synchronous>, transform_indices = @transform_4, window_bounds = array<i64: 4, 1>}, {transform_indices = @transform_5, window_bounds = array<i64: 1, 4, 256>}]} {
    %c0 = arith.constant 0 : index
    %c0_0 = arith.constant 0 : index
    %c0_1 = arith.constant 0 : index
    %0 = vector.load %arg2[%c0, %c0_0, %c0_1] : memref<1x4x256xf32, #tpu.memory_space<vmem>>, vector<1x4x256xf32>
    %1 = vector.shape_cast %0 : vector<1x4x256xf32> to vector<4x256xf32>
    %2 = arith.truncf %1 : vector<4x256xf32> to vector<4x256xbf16>
    %c0_2 = arith.constant 0 : index
    %c0_3 = arith.constant 0 : index
    %c0_4 = arith.constant 0 : index
    %3 = vector.load %arg3[%c0_2, %c0_3, %c0_4] : memref<1x32x4xbf16, #tpu.memory_space<vmem>>, vector<1x32x4xbf16>
    %4 = vector.shape_cast %3 : vector<1x32x4xbf16> to vector<32x4xbf16>
    %cst = arith.constant dense<0.000000e+00> : vector<32x256xf32>
    %5 = tpu.matmul %4, %2, %cst {dimension_numbers = #tpu.dot_dimension_numbers<[1], [0], [0], [1], [0, 0, 1, 1], [], []>} : vector<32x4xbf16>, vector<4x256xbf16>, vector<32x256xf32> -> vector<32x256xf32>
    %c0_5 = arith.constant 0 : index
    %c0_6 = arith.constant 0 : index
    %c0_7 = arith.constant 0 : index
    %6 = vector.load %arg4[%c0_5, %c0_6, %c0_7] : memref<1x32x1xf32, #tpu.memory_space<vmem>>, vector<1x32x1xf32>
    %7 = vector.shape_cast %6 : vector<1x32x1xf32> to vector<32x1xf32>
    %8 = vector.broadcast %7 : vector<32x1xf32> to vector<32x256xf32>
    %9 = arith.addf %5, %8 : vector<32x256xf32>
    %cst_8 = arith.constant 5.000000e-01 : f32
    %10 = vector.broadcast %cst_8 : f32 to vector<32x256xf32>
    %11 = arith.mulf %10, %9 : vector<32x256xf32>
    %cst_9 = arith.constant 0.707106769 : f32
    %12 = vector.broadcast %cst_9 : f32 to vector<32x256xf32>
    %13 = arith.mulf %9, %12 : vector<32x256xf32>
    %14 = math.erf %13 : vector<32x256xf32>
    %cst_10 = arith.constant 1.000000e+00 : f32
    %15 = vector.broadcast %cst_10 : f32 to vector<32x256xf32>
    %16 = arith.addf %15, %14 : vector<32x256xf32>
    %17 = arith.mulf %11, %16 : vector<32x256xf32>
    %c0_11 = arith.constant 0 : index
    %c0_12 = arith.constant 0 : index
    %c0_13 = arith.constant 0 : index
    %18 = vector.load %arg5[%c0_11, %c0_12, %c0_13] : memref<1x4x32xbf16, #tpu.memory_space<vmem>>, vector<1x4x32xbf16>
    %19 = vector.shape_cast %18 : vector<1x4x32xbf16> to vector<4x32xbf16>
    %20 = arith.truncf %17 : vector<32x256xf32> to vector<32x256xbf16>
    %cst_14 = arith.constant dense<0.000000e+00> : vector<4x256xf32>
    %21 = tpu.matmul %19, %20, %cst_14 {dimension_numbers = #tpu.dot_dimension_numbers<[1], [0], [0], [1], [0, 0, 1, 1], [], []>} : vector<4x32xbf16>, vector<32x256xbf16>, vector<4x256xf32> -> vector<4x256xf32>
    %c0_15 = arith.constant 0 : index
    %c0_16 = arith.constant 0 : index
    %22 = vector.load %arg6[%c0_15, %c0_16] : memref<4x1xf32, #tpu.memory_space<vmem>>, vector<4x1xf32>
    %23 = vector.broadcast %22 : vector<4x1xf32> to vector<4x256xf32>
    %24 = arith.addf %21, %23 : vector<4x256xf32>
    %c0_17 = arith.constant 0 : index
    %c0_18 = arith.constant 0 : index
    %c0_19 = arith.constant 0 : index
    %25 = vector.load %arg7[%c0_17, %c0_18, %c0_19] : memref<1x4x256xf32, #tpu.memory_space<vmem>>, vector<1x4x256xf32>
    %26 = vector.shape_cast %25 : vector<1x4x256xf32> to vector<4x256xf32>
    %27 = vector.shape_cast %24 : vector<4x256xf32> to vector<1x4x256xf32>
    tpu.vector_store %arg7[%c0_17, %c0_18, %c0_19], %27 {strides = array<i32>} : memref<1x4x256xf32, #tpu.memory_space<vmem>>, vector<1x4x256xf32>,
    return
  }
  func.func @transform_0(%arg0: i32, %arg1: i32) -> (i32, i32, i32) {
    %c0_i32 = arith.constant 0 : i32
    %c0_i32_0 = arith.constant 0 : i32
    return %arg0, %c0_i32, %arg1 : i32, i32, i32
  }
  func.func @transform_1(%arg0: i32, %arg1: i32) -> (i32, i32, i32) {
    %c0_i32 = arith.constant 0 : i32
    %c0_i32_0 = arith.constant 0 : i32
    %c0_i32_1 = arith.constant 0 : i32
    %c0_i32_2 = arith.constant 0 : i32
    return %c0_i32, %c0_i32_0, %c0_i32_1 : i32, i32, i32
  }
  func.func @transform_2(%arg0: i32, %arg1: i32) -> (i32, i32, i32) {
    %c0_i32 = arith.constant 0 : i32
    %c0_i32_0 = arith.constant 0 : i32
    %c0_i32_1 = arith.constant 0 : i32
    %c0_i32_2 = arith.constant 0 : i32
    return %c0_i32, %c0_i32_0, %c0_i32_1 : i32, i32, i32
  }
  func.func @transform_3(%arg0: i32, %arg1: i32) -> (i32, i32, i32) {
    %c0_i32 = arith.constant 0 : i32
    %c0_i32_0 = arith.constant 0 : i32
    %c0_i32_1 = arith.constant 0 : i32
    %c0_i32_2 = arith.constant 0 : i32
    return %c0_i32, %c0_i32_0, %c0_i32_1 : i32, i32, i32
  }
  func.func @transform_4(%arg0: i32, %arg1: i32) -> (i32, i32) {
    %c0_i32 = arith.constant 0 : i32
    %c0_i32_0 = arith.constant 0 : i32
    %c0_i32_1 = arith.constant 0 : i32
    return %c0_i32, %c0_i32_0 : i32, i32
  }
  func.func @transform_5(%arg0: i32, %arg1: i32) -> (i32, i32, i32) {
    %c0_i32 = arith.constant 0 : i32
    %c0_i32_0 = arith.constant 0 : i32
    return %arg0, %c0_i32, %arg1 : i32, i32, i32
  }
}

</mosaic_0001>

<llo_original>
// kernel: distributed_mlp_forward.1
$region0: #{distributed_mlp_forward.1}
  #allocation0 [shape = 'u32[]', space=smem, size = 0x4, offset = 0x4, fixed_abs, tag = 'smem constant byte address 0x4 - core index']
  #allocation1 [shape = 'u32[144,128]{1,0:T(1,128)}', space=vmem, size = 0x12000, scoped, tag = 'internal scratch']
  %s0 = inlined_call_operand.vmem [shape: f32[2,4,256], index: 0, kind: input, shape index: {}]
  %s1 = inlined_call_operand.vmem [shape: bf16[1,32,4], index: 1, kind: input, shape index: {}]
  %s2 = inlined_call_operand.vmem [shape: f32[1,32,1], index: 2, kind: input, shape index: {}]
  %s3 = inlined_call_operand.vmem [shape: bf16[1,4,32], index: 3, kind: input, shape index: {}]
  %s4 = inlined_call_operand.vmem [shape: f32[4,1], index: 4, kind: input, shape index: {}]
  %s5 = inlined_call_operand.vmem [shape: f32[2,4,256], index: 5, kind: output, shape index: {}]
  %s6 = sld [smem:[#allocation0]]
  $region53: #{distributed_mlp_forward.1} parent=0
    _
  %s8 = ssub.s32 1, %s6
  %s9 = scalar_select 0, %s8, %s6
  loop: start=0, step=1, limit=4
  $region2: #{distributed_mlp_forward.1} parent=0 // loop_pre_header
    _
  $region3: #{distributed_mlp_forward.1} parent=0 // loop_header
    %s11 = sphi 0, %s15
    %p12 = scmp.ge.s32.totalorder %s11, 4
    %s18 = sphi 0, %s30
    %s19 = sphi 0, %s26
    %s20 = sphi 0, %s18
    %s21 = sphi 0, %s19
    %s22 = sphi 0, %s20
    %s23 = sphi 0, %s21
    %s35 = sphi 0, %s37
    %s38 = sphi 0, %s35
    %s39 = sphi 0, %s38
    %s55 = sphi 0, %s39
    %s59 = sphi 0, %s59
    %s61 = sphi 0, %s59
    %s62 = sphi 0, %s61
    %s76 = sphi 0, %s62
    %s80 = sphi 0, %s80
    %s82 = sphi 0, %s80
    %s83 = sphi 0, %s82
    %s97 = sphi 0, %s83
    %s101 = sphi 0, %s101
    %s103 = sphi 0, %s101
    %s104 = sphi 0, %s103
    %s118 = sphi 0, %s104
    %s122 = sphi 0, %s122
    %s124 = sphi 0, %s122
    %s125 = sphi 0, %s124
    %s139 = sphi 0, %s125
    %s147 = sphi 0, %s149
    %s150 = sphi 0, %s147
    %s151 = sphi 0, %s150
    %s167 = sphi 0, %s151
  $region4: #{distributed_mlp_forward.1} parent=0 // loop_header_branch
    %14 = sbr.rel (%p12) target = $region8
  $region5: #{distributed_mlp_forward.1} parent=0 // loop_body
    %s16 = ssub.s32 %s11, 1
    %s17 = ssub.s32 %s11, 2
    %s24 = sadd.s32 1, %s19
    %p25 = scmp.ge.s32.totalorder %s24, 1
    %s26 = scalar_select %p25, 0, %s24
    %s27 = sadd.s32 1, %s18
    %s28 = scalar_select %p25, %s27, %s18
    %p29 = scmp.ge.s32.totalorder %s28, 2
    %s30 = scalar_select %p29, 0, %s28
    %s31 = ssub.s32 %s18, %s30
    %s32 = ssub.s32 %s19, %s26
    %s33 = sor.u32 %s31, %s32
    %p34 = scmp.eq.s32.totalorder %s33, 0
    %s36 = sadd.s32 %s35, 1
    %s37 = scalar_select %p34, %s35, %s36
    %p40 = pneg %p34
    %p41 = scmp.eq.s32.totalorder %s11, 1
    %p42 = por %p40, %p41
    %p43 = scmp.ne.s32.totalorder %s35, %s38
    %p44 = scmp.eq.s32.totalorder %s11, 0
    %p45 = por %p43, %p44
    %p46 = scmp.ne.s32.totalorder %s35, %s38
    %p47 = scmp.eq.s32.totalorder %s16, 1
    %p48 = por %p46, %p47
    %p49 = scmp.ne.s32.totalorder %s38, %s39
    %p50 = scmp.eq.s32.totalorder %s16, 0
    %p51 = por %p49, %p50
    %p52 = scmp.ne.s32.totalorder %s38, %s39
    %p53 = scmp.eq.s32.totalorder %s17, 1
    %p54 = por %p52, %p53
    %p56 = scmp.ne.s32.totalorder %s39, %s55
    %p57 = scmp.eq.s32.totalorder %s17, 0
    %p58 = por %p56, %p57
    %s60 = sadd.s32 %s59, 1
    %p63 = scmp.eq.s32.totalorder %s11, 1
    %p64 = scmp.ne.s32.totalorder %s59, %s61
    %p65 = scmp.eq.s32.totalorder %s11, 0
    %p66 = por %p64, %p65
    %p67 = scmp.ne.s32.totalorder %s59, %s61
    %p68 = scmp.eq.s32.totalorder %s16, 1
    %p69 = por %p67, %p68
    %p70 = scmp.ne.s32.totalorder %s61, %s62
    %p71 = scmp.eq.s32.totalorder %s16, 0
    %p72 = por %p70, %p71
    %p73 = scmp.ne.s32.totalorder %s61, %s62
    %p74 = scmp.eq.s32.totalorder %s17, 1
    %p75 = por %p73, %p74
    %p77 = scmp.ne.s32.totalorder %s62, %s76
    %p78 = scmp.eq.s32.totalorder %s17, 0
    %p79 = por %p77, %p78
    %s81 = sadd.s32 %s80, 1
    %p84 = scmp.eq.s32.totalorder %s11, 1
    %p85 = scmp.ne.s32.totalorder %s80, %s82
    %p86 = scmp.eq.s32.totalorder %s11, 0
    %p87 = por %p85, %p86
    %p88 = scmp.ne.s32.totalorder %s80, %s82
    %p89 = scmp.eq.s32.totalorder %s16, 1
    %p90 = por %p88, %p89
    %p91 = scmp.ne.s32.totalorder %s82, %s83
    %p92 = scmp.eq.s32.totalorder %s16, 0
    %p93 = por %p91, %p92
    %p94 = scmp.ne.s32.totalorder %s82, %s83
    %p95 = scmp.eq.s32.totalorder %s17, 1
    %p96 = por %p94, %p95
    %p98 = scmp.ne.s32.totalorder %s83, %s97
    %p99 = scmp.eq.s32.totalorder %s17, 0
    %p100 = por %p98, %p99
    %s102 = sadd.s32 %s101, 1
    %p105 = scmp.eq.s32.totalorder %s11, 1
    %p106 = scmp.ne.s32.totalorder %s101, %s103
    %p107 = scmp.eq.s32.totalorder %s11, 0
    %p108 = por %p106, %p107
    %p109 = scmp.ne.s32.totalorder %s101, %s103
    %p110 = scmp.eq.s32.totalorder %s16, 1
    %p111 = por %p109, %p110
    %p112 = scmp.ne.s32.totalorder %s103, %s104
    %p113 = scmp.eq.s32.totalorder %s16, 0
    %p114 = por %p112, %p113
    %p115 = scmp.ne.s32.totalorder %s103, %s104
    %p116 = scmp.eq.s32.totalorder %s17, 1
    %p117 = por %p115, %p116
    %p119 = scmp.ne.s32.totalorder %s104, %s118
    %p120 = scmp.eq.s32.totalorder %s17, 0
    %p121 = por %p119, %p120
    %s123 = sadd.s32 %s122, 1
    %p126 = scmp.eq.s32.totalorder %s11, 1
    %p127 = scmp.ne.s32.totalorder %s122, %s124
    %p128 = scmp.eq.s32.totalorder %s11, 0
    %p129 = por %p127, %p128
    %p130 = scmp.ne.s32.totalorder %s122, %s124
    %p131 = scmp.eq.s32.totalorder %s16, 1
    %p132 = por %p130, %p131
    %p133 = scmp.ne.s32.totalorder %s124, %s125
    %p134 = scmp.eq.s32.totalorder %s16, 0
    %p135 = por %p133, %p134
    %p136 = scmp.ne.s32.totalorder %s124, %s125
    %p137 = scmp.eq.s32.totalorder %s17, 1
    %p138 = por %p136, %p137
    %p140 = scmp.ne.s32.totalorder %s125, %s139
    %p141 = scmp.eq.s32.totalorder %s17, 0
    %p142 = por %p140, %p141
    %s143 = ssub.s32 %s18, %s30
    %s144 = ssub.s32 %s19, %s26
    %s145 = sor.u32 %s143, %s144
    %p146 = scmp.eq.s32.totalorder %s145, 0
    %s148 = sadd.s32 %s147, 1
    %s149 = scalar_select %p146, %s147, %s148
    %p152 = pneg %p146
    %p153 = scmp.eq.s32.totalorder %s11, 1
    %p154 = por %p152, %p153
    %p155 = scmp.ne.s32.totalorder %s147, %s150
    %p156 = scmp.eq.s32.totalorder %s11, 0
    %p157 = por %p155, %p156
    %p158 = scmp.ne.s32.totalorder %s147, %s150
    %p159 = scmp.eq.s32.totalorder %s16, 1
    %p160 = por %p158, %p159
    %p161 = scmp.ne.s32.totalorder %s150, %s151
    %p162 = scmp.eq.s32.totalorder %s16, 0
    %p163 = por %p161, %p162
    %p164 = scmp.ne.s32.totalorder %s150, %s151
    %p165 = scmp.eq.s32.totalorder %s17, 1
    %p166 = por %p164, %p165
    %p168 = scmp.ne.s32.totalorder %s151, %s167
    %p169 = scmp.eq.s32.totalorder %s17, 0
    %p170 = por %p168, %p169
    %p171 = scmp.le.s32.totalorder 1, %s11
    %p172 = scmp.lt.s32.totalorder %s11, 3
    %p173 = pnand %p171, %p172
    %p174 = pneg %p173
    // Predicated region
    $region9: #{distributed_mlp_forward.1} parent=5 // pred_check
      _
    $region10: #{distributed_mlp_forward.1} parent=5 // pred_check_branch
      %176 = sbr.rel (%p173) target = $region12
    $region11: #{distributed_mlp_forward.1} parent=5 // pred_region
      %s177 = ssub.s32 %s11, 1
      // Predicated region
      $region13: #{distributed_mlp_forward.1} parent=11 // pred_check
        %p178 = pneg %p72
      $region14: #{distributed_mlp_forward.1} parent=11 // pred_check_branch
        %180 = sbr.rel (%p178) target = $region16
      $region15: #{distributed_mlp_forward.1} parent=11 // pred_region
        _
      $region16: #{distributed_mlp_forward.1} parent=11 // pred_fallthru
        _
      // Predicated region
      $region17: #{distributed_mlp_forward.1} parent=11 // pred_check
        %p181 = pneg %p93
      $region18: #{distributed_mlp_forward.1} parent=11 // pred_check_branch
        %183 = sbr.rel (%p181) target = $region20
      $region19: #{distributed_mlp_forward.1} parent=11 // pred_region
        _
      $region20: #{distributed_mlp_forward.1} parent=11 // pred_fallthru
        _
      // Predicated region
      $region21: #{distributed_mlp_forward.1} parent=11 // pred_check
        %p184 = pneg %p114
      $region22: #{distributed_mlp_forward.1} parent=11 // pred_check_branch
        %186 = sbr.rel (%p184) target = $region24
      $region23: #{distributed_mlp_forward.1} parent=11 // pred_region
        _
      $region24: #{distributed_mlp_forward.1} parent=11 // pred_fallthru
        _
      // Predicated region
      $region25: #{distributed_mlp_forward.1} parent=11 // pred_check
        %p187 = pneg %p135
      $region26: #{distributed_mlp_forward.1} parent=11 // pred_check_branch
        %189 = sbr.rel (%p187) target = $region28
      $region27: #{distributed_mlp_forward.1} parent=11 // pred_region
        _
      $region28: #{distributed_mlp_forward.1} parent=11 // pred_fallthru
        _
    $region12: #{distributed_mlp_forward.1} parent=5 // pred_fallthru
      _
    %p190 = scmp.lt.s32.totalorder %s11, 2
    // Predicated region
    $region29: #{distributed_mlp_forward.1} parent=5 // pred_check
      %p191 = pneg %p190
    $region30: #{distributed_mlp_forward.1} parent=5 // pred_check_branch
      %193 = sbr.rel (%p191) target = $region32
    $region31: #{distributed_mlp_forward.1} parent=5 // pred_region
      // Predicated region
      $region33: #{distributed_mlp_forward.1} parent=31 // pred_check
        %p194 = pneg %p45
      $region34: #{distributed_mlp_forward.1} parent=31 // pred_check_branch
        %196 = sbr.rel (%p194) target = $region36
      $region35: #{distributed_mlp_forward.1} parent=31 // pred_region
        %s197 = smul.u32 2, %s19
        %p198 = scmp.lt.s32.totalorder %s18, 1
        %s199 = scalar_select %p198, %s18, 1
        %p200 = scmp.lt.s32.totalorder %s197, 1
        %s201 = scalar_select %p200, %s197, 1
        %s202 = smul.addr %s199, 2
        %s203 = sadd.s32 %s201, %s202
        %s204 = smul.addr %s203, 4
        %s205 = scalar_lea.vmem %s0, %s204
        %s206 = smul.u32 2, %s19
      $region36: #{distributed_mlp_forward.1} parent=31 // pred_fallthru
        _
    $region32: #{distributed_mlp_forward.1} parent=5 // pred_fallthru
      _
    %p207 = scmp.le.s32.totalorder 1, %s11
    %p208 = scmp.lt.s32.totalorder %s11, 3
    %p209 = pnand %p207, %p208
    %p210 = pneg %p209
    // Predicated region
    $region37: #{distributed_mlp_forward.1} parent=5 // pred_check
      _
    $region38: #{distributed_mlp_forward.1} parent=5 // pred_check_branch
      %212 = sbr.rel (%p209) target = $region40
    $region39: #{distributed_mlp_forward.1} parent=5 // pred_region
      %s213 = ssub.s32 %s11, 1
      %s214 = smul.u32 2, %s21
      %p215 = scmp.lt.s32.totalorder %s20, 1
      %s216 = scalar_select %p215, %s20, 1
      %p217 = scmp.lt.s32.totalorder %s214, 1
      %s218 = scalar_select %p217, %s214, 1
      %s219 = smul.addr %s216, 2
      %s220 = sadd.s32 %s218, %s219
      %s221 = smul.addr %s220, 4
      %s222 = scalar_lea.vmem %s0, %s221
      %p223 = pneg %p51
      %p224 = pneg %p48
      %p225 = pneg %p72
      %p226 = pneg %p69
      %p227 = pneg %p93
      %p228 = pneg %p90
      %p229 = pneg %p114
      %p230 = pneg %p111
      %p231 = pneg %p135
      %p232 = pneg %p132
      %p233 = pneg %p163
      %p234 = pneg %p160
      %s235 = smul.u32 2, %s21
      %p236 = scmp.lt.s32.totalorder %s20, 1
      %s237 = scalar_select %p236, %s20, 1
      %p238 = scmp.lt.s32.totalorder %s235, 1
      %s239 = scalar_select %p238, %s235, 1
      %s240 = smul.addr %s237, 2
      %s241 = sadd.s32 %s239, %s240
      %s242 = smul.addr %s241, 4
      %s243 = scalar_lea.vmem %s5, %s242
      %s244 = smul.u32 2, %s21
      %p245 = scmp.lt.s32.totalorder %s20, 1
      %s246 = scalar_select %p245, %s20, 1
      %p247 = scmp.lt.s32.totalorder %s244, 1
      %s248 = scalar_select %p247, %s244, 1
      %s249 = smul.addr %s246, 2
      %s250 = sadd.s32 %s248, %s249
      %s251 = smul.addr %s250, 4
      %s252 = scalar_lea.vmem %s0, %s251
      %s253 = smul.u32 2, %s21
      %s254 = smul.u32 2, %s21
      %p255 = scmp.lt.s32.totalorder %s20, 1
      %s256 = scalar_select %p255, %s20, 1
      %p257 = scmp.lt.s32.totalorder %s254, 1
      %s258 = scalar_select %p257, %s254, 1
      %s259 = smul.addr %s256, 2
      %s260 = sadd.s32 %s258, %s259
      %s261 = smul.addr %s260, 4
      %s262 = scalar_lea.vmem %s5, %s261
      %s263 = smul.u32 2, %s21
      %v265 = vld [vmem:[%s252] sm:$0xff]
      %v267 = vcombine.high %v265, %v265
      %v269 = vpack.c.bf16 %v265, %v265
      %v270 = vpack.c.bf16 %v267, %v267
      %v271 = vld [vmem:[%s1] sm:$0xf]
      %v272 = vld [vmem:[%s1 + $0x4] sm:$0xf]
      %v273 = vld [vmem:[%s1 + $0x8] sm:$0xf]
      %v274 = vld [vmem:[%s1 + $0xc] sm:$0xf]
      %v275 = vld [vmem:[%s2] sm:$0xff]
      %v276 = vld [vmem:[%s2 + $0x8] sm:$0xff]
      %v277 = vld [vmem:[%s2 + $0x10] sm:$0xff]
      %v278 = vld [vmem:[%s2 + $0x18] sm:$0xff]
      %280 = vset.pattern.permute.xlu0 0
      %281 = vperm.xlu0 %280, %v275
      %v282 = vpop.permute.xlu0 %281
      %285 = vset.pattern.permute.xlu0 0
      %286 = vperm.xlu0 %285, %v276
      %v287 = vpop.permute.xlu0 %286
      %290 = vset.pattern.permute.xlu0 0
      %291 = vperm.xlu0 %290, %v277
      %v292 = vpop.permute.xlu0 %291
      %295 = vset.pattern.permute.xlu0 0
      %296 = vperm.xlu0 %295, %v278
      %v297 = vpop.permute.xlu0 %296
      %v303 = vunpack.c.l.b16 %v271
      %v304 = vunpack.c.l.b16 %v272
      %v305 = vunpack.c.l.b16 %v273
      %v306 = vunpack.c.l.b16 %v274
      %v307 = vpack.c.b16 %v304, %v303
      %v308 = vpack.c.b16 %v306, %v305
      %vm309 = vcmask 31744
      %v311 = vsel %vm309, %v307, 0
      %v314 = vsel %vm309, %v308, 0
      %vm316 = vcmask 1041408
      %v318 = vsel %vm316, %v269, 0
      %v321 = vsel %vm316, %v270, 0
      %323 = vmatprep.subr.bf16.mxu0 0
      %324 = vmatpush1.bf16.msra.mxu0 0
      %325 = vmatprep.subr.bf16.mxu0 0
      %326 = vmatpush1.bf16.msra.mxu0 0
      %327 = vmatprep.subr.bf16.mxu0 0
      %328 = vmatpush1.bf16.msra.mxu0 0
      %329 = vmatprep.subr.bf16.mxu0 0
      %330 = vmatpush1.bf16.msra.mxu0 0
      %331 = vmatprep.subr.bf16.mxu0 0
      %332 = vmatpush1.bf16.msra.mxu0 0
      %333 = vmatprep.subr.bf16.mxu0 0
      %334 = vmatpush1.bf16.msra.mxu0 0
      %335 = vmatprep.subr.bf16.mxu0 0
      %336 = vmatpush1.bf16.msra.mxu0 0
      %337 = vmatprep.subr.bf16.mxu0 %v321
      %338 = vmatpush1.bf16.msra.mxu0 %v318
      %339 = vmatprep.subr.bf16.mxu0 0
      %340 = vmatpush2.bf16.msra.mxu0 0
      %341 = vmatprep.subr.bf16.mxu0 0
      %342 = vmatpush2.bf16.msra.mxu0 0
      %343 = vmatprep.subr.bf16.mxu0 0
      %344 = vmatpush2.bf16.msra.mxu0 0
      %345 = vmatprep.subr.bf16.mxu0 0
      %346 = vmatpush2.bf16.msra.mxu0 0
      %347 = vmatprep.subr.bf16.mxu0 0
      %348 = vmatpush2.bf16.msra.mxu0 0
      %349 = vmatprep.subr.bf16.mxu0 0
      %350 = vmatpush2.bf16.msra.mxu0 0
      %351 = vmatprep.subr.bf16.mxu0 0
      %352 = vmatpush2.bf16.msra.mxu0 0
      %353 = vmatprep.subr.bf16.mxu0 0
      %354 = vmatpush2.bf16.msra.mxu0 0
      %355 = vmatprep.mubr.bf16.mxu0 0
      %356 = vmatmul.mubr.bf16.gmra.mxu0 %v311
      %v357 = vpop.f32.mrf.mxu0
      %v358 = vadd.f32 %v282, %v357
      %v359 = vpop.f32.mrf.mxu0
      %v360 = vadd.f32 %v282, %v359
      %v361 = vpop.f32.mrf.mxu0
      %v362 = vadd.f32 %v287, %v361
      %v363 = vpop.f32.mrf.mxu0
      %v364 = vadd.f32 %v287, %v363
      %365 = vmatprep.mubr.bf16.mxu0 0
      %366 = vmatmul.mubr.bf16.gmra.mxu0 %v314
      %v367 = vpop.f32.mrf.mxu0
      %v368 = vadd.f32 %v292, %v367
      %v369 = vpop.f32.mrf.mxu0
      %v370 = vadd.f32 %v292, %v369
      %v371 = vpop.f32.mrf.mxu0
      %v372 = vadd.f32 %v297, %v371
      %v373 = vpop.f32.mrf.mxu0
      %v374 = vadd.f32 %v297, %v373
      %375 = vdwg.mxu0
      %v376 = vmul.f32 %v358, 0.5
      %v377 = vmul.f32 %v360, 0.5
      %v378 = vmul.f32 %v362, 0.5
      %v379 = vmul.f32 %v364, 0.5
      %v380 = vmul.f32 %v368, 0.5
      %v381 = vmul.f32 %v370, 0.5
      %v382 = vmul.f32 %v372, 0.5
      %v383 = vmul.f32 %v374, 0.5
      %v384 = vmul.f32 %v358, 0.70710677
      %v385 = vmul.f32 %v360, 0.70710677
      %v386 = vmul.f32 %v362, 0.70710677
      %v387 = vmul.f32 %v364, 0.70710677
      %v388 = vmul.f32 %v368, 0.70710677
      %v389 = vmul.f32 %v370, 0.70710677
      %v390 = vmul.f32 %v372, 0.70710677
      %v391 = vmul.f32 %v374, 0.70710677
      %v392 = verf.f32.pop %v384
      %v393 = verf.f32.pop %v385
      %v394 = verf.f32.pop %v386
      %v395 = verf.f32.pop %v387
      %v396 = verf.f32.pop %v388
      %v397 = verf.f32.pop %v389
      %v398 = verf.f32.pop %v390
      %v399 = verf.f32.pop %v391
      %v400 = vadd.f32 %v392, 1.0
      %v401 = vadd.f32 %v393, 1.0
      %v402 = vadd.f32 %v394, 1.0
      %v403 = vadd.f32 %v395, 1.0
      %v404 = vadd.f32 %v396, 1.0
      %v405 = vadd.f32 %v397, 1.0
      %v406 = vadd.f32 %v398, 1.0
      %v407 = vadd.f32 %v399, 1.0
      %v408 = vmul.f32 %v376, %v400
      %v409 = vmul.f32 %v377, %v401
      %v410 = vmul.f32 %v378, %v402
      %v411 = vmul.f32 %v379, %v403
      %v412 = vmul.f32 %v380, %v404
      %v413 = vmul.f32 %v381, %v405
      %v414 = vmul.f32 %v382, %v406
      %v415 = vmul.f32 %v383, %v407
      %v416 = vld [vmem:[%s3] sm:$0x3]
      %v417 = vpack.c.bf16 %v410, %v408
      %v418 = vpack.c.bf16 %v411, %v409
      %v419 = vpack.c.bf16 %v414, %v412
      %v420 = vpack.c.bf16 %v415, %v413
      %v421 = vld [vmem:[%s4] sm:$0xf]
      %423 = vset.pattern.permute.xlu0 0
      %424 = vperm.xlu0 %423, %v421
      %v425 = vpop.permute.xlu0 %424
      %vm427 = vcmask 261120
      %v429 = vsel %vm427, %v416, 0
      %431 = vmatprep.subr.bf16.mxu0 0
      %432 = vmatpush1.bf16.msra.mxu0 0
      %433 = vmatprep.subr.bf16.mxu0 0
      %434 = vmatpush1.bf16.msra.mxu0 0
      %435 = vmatprep.subr.bf16.mxu0 0
      %436 = vmatpush1.bf16.msra.mxu0 0
      %437 = vmatprep.subr.bf16.mxu0 0
      %438 = vmatpush1.bf16.msra.mxu0 0
      %439 = vmatprep.subr.bf16.mxu0 0
      %440 = vmatpush1.bf16.msra.mxu0 0
      %441 = vmatprep.subr.bf16.mxu0 0
      %442 = vmatpush1.bf16.msra.mxu0 0
      %443 = vmatprep.subr.bf16.mxu0 %v420
      %444 = vmatpush1.bf16.msra.mxu0 %v419
      %445 = vmatprep.subr.bf16.mxu0 %v418
      %446 = vmatpush1.bf16.msra.mxu0 %v417
      %447 = vmatprep.subr.bf16.mxu0 0
      %448 = vmatpush2.bf16.msra.mxu0 0
      %449 = vmatprep.subr.bf16.mxu0 0
      %450 = vmatpush2.bf16.msra.mxu0 0
      %451 = vmatprep.subr.bf16.mxu0 0
      %452 = vmatpush2.bf16.msra.mxu0 0
      %453 = vmatprep.subr.bf16.mxu0 0
      %454 = vmatpush2.bf16.msra.mxu0 0
      %455 = vmatprep.subr.bf16.mxu0 0
      %456 = vmatpush2.bf16.msra.mxu0 0
      %457 = vmatprep.subr.bf16.mxu0 0
      %458 = vmatpush2.bf16.msra.mxu0 0
      %459 = vmatprep.subr.bf16.mxu0 0
      %460 = vmatpush2.bf16.msra.mxu0 0
      %461 = vmatprep.subr.bf16.mxu0 0
      %462 = vmatpush2.bf16.msra.mxu0 0
      %463 = vmatprep.mubr.bf16.mxu0 0
      %464 = vmatmul.mubr.bf16.gmra.mxu0 %v429
      %v465 = vpop.f32.mrf.mxu0
      %v466 = vadd.f32 %v425, %v465
      %v467 = vpop.f32.mrf.mxu0
      %v468 = vadd.f32 %v425, %v467
      %v469 = vpop.f32.mrf.mxu0
      %v470 = vpop.f32.mrf.mxu0
      %471 = vdwg.mxu0
      %v474 = vcombine.low %v466, %v468
      %476 = vst [vmem:[%s262] sm:$0xff] %v474
      %s477 = smul.u32 2, %s21
      %p478 = scmp.lt.s32.totalorder %s20, 1
      %s479 = scalar_select %p478, %s20, 1
      %p480 = scmp.lt.s32.totalorder %s477, 1
      %s481 = scalar_select %p480, %s477, 1
      %s482 = smul.addr %s479, 2
      %s483 = sadd.s32 %s481, %s482
      %s484 = smul.addr %s483, 4
      %s485 = scalar_lea.vmem %s5, %s484
      // Predicated region
      $region41: #{distributed_mlp_forward.1} parent=39 // pred_check
        %p486 = pneg %p160
      $region42: #{distributed_mlp_forward.1} parent=39 // pred_check_branch
        %488 = sbr.rel (%p486) target = $region44
      $region43: #{distributed_mlp_forward.1} parent=39 // pred_region
        %s489 = smul.u32 2, %s21
      $region44: #{distributed_mlp_forward.1} parent=39 // pred_fallthru
        _
    $region40: #{distributed_mlp_forward.1} parent=5 // pred_fallthru
      _
    %p490 = scmp.le.s32.totalorder 2, %s11
    // Predicated region
    $region45: #{distributed_mlp_forward.1} parent=5 // pred_check
      %p491 = pneg %p490
    $region46: #{distributed_mlp_forward.1} parent=5 // pred_check_branch
      %493 = sbr.rel (%p491) target = $region48
    $region47: #{distributed_mlp_forward.1} parent=5 // pred_region
      %s494 = ssub.s32 %s11, 2
      // Predicated region
      $region49: #{distributed_mlp_forward.1} parent=47 // pred_check
        %p495 = pneg %p166
      $region50: #{distributed_mlp_forward.1} parent=47 // pred_check_branch
        %497 = sbr.rel (%p495) target = $region52
      $region51: #{distributed_mlp_forward.1} parent=47 // pred_region
        %s498 = smul.u32 2, %s23
        %p499 = scmp.lt.s32.totalorder %s22, 1
        %s500 = scalar_select %p499, %s22, 1
        %p501 = scmp.lt.s32.totalorder %s498, 1
        %s502 = scalar_select %p501, %s498, 1
        %s503 = smul.addr %s500, 2
        %s504 = sadd.s32 %s502, %s503
        %s505 = smul.addr %s504, 4
        %s506 = scalar_lea.vmem %s5, %s505
      $region52: #{distributed_mlp_forward.1} parent=47 // pred_fallthru
        _
    $region48: #{distributed_mlp_forward.1} parent=5 // pred_fallthru
      _
  $region6: #{distributed_mlp_forward.1} parent=0 // loop_footer
    %s15 = sadd.s32 1, %s11
  $region7: #{distributed_mlp_forward.1} parent=0 // loop_footer_branch
    %10 = sbr.rel target = $region3
  $region8: #{distributed_mlp_forward.1} parent=0 // loop_exit
    _

// kernel: distributed_mlp_forward.1
$region0: #{distributed_mlp_forward.1}
  #allocation0 [shape = 'u32[]', space=smem, size = 0x4, offset = 0x4, fixed_abs, tag = 'smem constant byte address 0x4 - core index']
  #allocation1 [shape = 'u32[144,128]{1,0:T(1,128)}', space=vmem, size = 0x12000, scoped, tag = 'internal scratch']
  %s0 = inlined_call_operand.vmem [shape: f32[2,4,256], index: 0, kind: input, shape index: {}]
  %s1 = inlined_call_operand.vmem [shape: bf16[1,32,4], index: 1, kind: input, shape index: {}]
  %s2 = inlined_call_operand.vmem [shape: f32[1,32,1], index: 2, kind: input, shape index: {}]
  %s3 = inlined_call_operand.vmem [shape: bf16[1,4,32], index: 3, kind: input, shape index: {}]
  %s4 = inlined_call_operand.vmem [shape: f32[4,1], index: 4, kind: input, shape index: {}]
  %s5 = inlined_call_operand.vmem [shape: f32[2,4,256], index: 5, kind: output, shape index: {}]
  %s6 = sld [smem:[#allocation0]]
  $region53: #{distributed_mlp_forward.1} parent=0
    _
  %s8 = ssub.s32 1, %s6
  %s9 = scalar_select 0, %s8, %s6
  loop: start=0, step=1, limit=4
  $region2: #{distributed_mlp_forward.1} parent=0 // loop_pre_header
    _
  $region3: #{distributed_mlp_forward.1} parent=0 // loop_header
    %s11 = sphi 0, %s15
    %p12 = scmp.ge.s32.totalorder %s11, 4
    %s18 = sphi 0, %s30
    %s19 = sphi 0, %s26
    %s20 = sphi 0, %s18
    %s21 = sphi 0, %s19
    %s22 = sphi 0, %s20
    %s23 = sphi 0, %s21
    %s35 = sphi 0, %s37
    %s38 = sphi 0, %s35
    %s39 = sphi 0, %s38
    %s55 = sphi 0, %s39
    %s59 = sphi 0, %s59
    %s61 = sphi 0, %s59
    %s62 = sphi 0, %s61
    %s76 = sphi 0, %s62
    %s80 = sphi 0, %s80
    %s82 = sphi 0, %s80
    %s83 = sphi 0, %s82
    %s97 = sphi 0, %s83
    %s101 = sphi 0, %s101
    %s103 = sphi 0, %s101
    %s104 = sphi 0, %s103
    %s118 = sphi 0, %s104
    %s122 = sphi 0, %s122
    %s124 = sphi 0, %s122
    %s125 = sphi 0, %s124
    %s139 = sphi 0, %s125
    %s147 = sphi 0, %s149
    %s150 = sphi 0, %s147
    %s151 = sphi 0, %s150
    %s167 = sphi 0, %s151
  $region4: #{distributed_mlp_forward.1} parent=0 // loop_header_branch
    %14 = sbr.rel (%p12) target = $region8
  $region5: #{distributed_mlp_forward.1} parent=0 // loop_body
    %s16 = ssub.s32 %s11, 1
    %s17 = ssub.s32 %s11, 2
    %s24 = sadd.s32 1, %s19
    %p25 = scmp.ge.s32.totalorder %s24, 1
    %s26 = scalar_select %p25, 0, %s24
    %s27 = sadd.s32 1, %s18
    %s28 = scalar_select %p25, %s27, %s18
    %p29 = scmp.ge.s32.totalorder %s28, 2
    %s30 = scalar_select %p29, 0, %s28
    %s31 = ssub.s32 %s18, %s30
    %s32 = ssub.s32 %s19, %s26
    %s33 = sor.u32 %s31, %s32
    %p34 = scmp.eq.s32.totalorder %s33, 0
    %s36 = sadd.s32 %s35, 1
    %s37 = scalar_select %p34, %s35, %s36
    %p40 = pneg %p34
    %p41 = scmp.eq.s32.totalorder %s11, 1
    %p42 = por %p40, %p41
    %p43 = scmp.ne.s32.totalorder %s35, %s38
    %p44 = scmp.eq.s32.totalorder %s11, 0
    %p45 = por %p43, %p44
    %p46 = scmp.ne.s32.totalorder %s35, %s38
    %p47 = scmp.eq.s32.totalorder %s16, 1
    %p48 = por %p46, %p47
    %p49 = scmp.ne.s32.totalorder %s38, %s39
    %p50 = scmp.eq.s32.totalorder %s16, 0
    %p51 = por %p49, %p50
    %p52 = scmp.ne.s32.totalorder %s38, %s39
    %p53 = scmp.eq.s32.totalorder %s17, 1
    %p54 = por %p52, %p53
    %p56 = scmp.ne.s32.totalorder %s39, %s55
    %p57 = scmp.eq.s32.totalorder %s17, 0
    %p58 = por %p56, %p57
    %s60 = sadd.s32 %s59, 1
    %p63 = scmp.eq.s32.totalorder %s11, 1
    %p64 = scmp.ne.s32.totalorder %s59, %s61
    %p65 = scmp.eq.s32.totalorder %s11, 0
    %p66 = por %p64, %p65
    %p67 = scmp.ne.s32.totalorder %s59, %s61
    %p68 = scmp.eq.s32.totalorder %s16, 1
    %p69 = por %p67, %p68
    %p70 = scmp.ne.s32.totalorder %s61, %s62
    %p71 = scmp.eq.s32.totalorder %s16, 0
    %p72 = por %p70, %p71
    %p73 = scmp.ne.s32.totalorder %s61, %s62
    %p74 = scmp.eq.s32.totalorder %s17, 1
    %p75 = por %p73, %p74
    %p77 = scmp.ne.s32.totalorder %s62, %s76
    %p78 = scmp.eq.s32.totalorder %s17, 0
    %p79 = por %p77, %p78
    %s81 = sadd.s32 %s80, 1
    %p84 = scmp.eq.s32.totalorder %s11, 1
    %p85 = scmp.ne.s32.totalorder %s80, %s82
    %p86 = scmp.eq.s32.totalorder %s11, 0
    %p87 = por %p85, %p86
    %p88 = scmp.ne.s32.totalorder %s80, %s82
    %p89 = scmp.eq.s32.totalorder %s16, 1
    %p90 = por %p88, %p89
    %p91 = scmp.ne.s32.totalorder %s82, %s83
    %p92 = scmp.eq.s32.totalorder %s16, 0
    %p93 = por %p91, %p92
    %p94 = scmp.ne.s32.totalorder %s82, %s83
    %p95 = scmp.eq.s32.totalorder %s17, 1
    %p96 = por %p94, %p95
    %p98 = scmp.ne.s32.totalorder %s83, %s97
    %p99 = scmp.eq.s32.totalorder %s17, 0
    %p100 = por %p98, %p99
    %s102 = sadd.s32 %s101, 1
    %p105 = scmp.eq.s32.totalorder %s11, 1
    %p106 = scmp.ne.s32.totalorder %s101, %s103
    %p107 = scmp.eq.s32.totalorder %s11, 0
    %p108 = por %p106, %p107
    %p109 = scmp.ne.s32.totalorder %s101, %s103
    %p110 = scmp.eq.s32.totalorder %s16, 1
    %p111 = por %p109, %p110
    %p112 = scmp.ne.s32.totalorder %s103, %s104
    %p113 = scmp.eq.s32.totalorder %s16, 0
    %p114 = por %p112, %p113
    %p115 = scmp.ne.s32.totalorder %s103, %s104
    %p116 = scmp.eq.s32.totalorder %s17, 1
    %p117 = por %p115, %p116
    %p119 = scmp.ne.s32.totalorder %s104, %s118
    %p120 = scmp.eq.s32.totalorder %s17, 0
    %p121 = por %p119, %p120
    %s123 = sadd.s32 %s122, 1
    %p126 = scmp.eq.s32.totalorder %s11, 1
    %p127 = scmp.ne.s32.totalorder %s122, %s124
    %p128 = scmp.eq.s32.totalorder %s11, 0
    %p129 = por %p127, %p128
    %p130 = scmp.ne.s32.totalorder %s122, %s124
    %p131 = scmp.eq.s32.totalorder %s16, 1
    %p132 = por %p130, %p131
    %p133 = scmp.ne.s32.totalorder %s124, %s125
    %p134 = scmp.eq.s32.totalorder %s16, 0
    %p135 = por %p133, %p134
    %p136 = scmp.ne.s32.totalorder %s124, %s125
    %p137 = scmp.eq.s32.totalorder %s17, 1
    %p138 = por %p136, %p137
    %p140 = scmp.ne.s32.totalorder %s125, %s139
    %p141 = scmp.eq.s32.totalorder %s17, 0
    %p142 = por %p140, %p141
    %s143 = ssub.s32 %s18, %s30
    %s144 = ssub.s32 %s19, %s26
    %s145 = sor.u32 %s143, %s144
    %p146 = scmp.eq.s32.totalorder %s145, 0
    %s148 = sadd.s32 %s147, 1
    %s149 = scalar_select %p146, %s147, %s148
    %p152 = pneg %p146
    %p153 = scmp.eq.s32.totalorder %s11, 1
    %p154 = por %p152, %p153
    %p155 = scmp.ne.s32.totalorder %s147, %s150
    %p156 = scmp.eq.s32.totalorder %s11, 0
    %p157 = por %p155, %p156
    %p158 = scmp.ne.s32.totalorder %s147, %s150
    %p159 = scmp.eq.s32.totalorder %s16, 1
    %p160 = por %p158, %p159
    %p161 = scmp.ne.s32.totalorder %s150, %s151
    %p162 = scmp.eq.s32.totalorder %s16, 0
    %p163 = por %p161, %p162
    %p164 = scmp.ne.s32.totalorder %s150, %s151
    %p165 = scmp.eq.s32.totalorder %s17, 1
    %p166 = por %p164, %p165
    %p168 = scmp.ne.s32.totalorder %s151, %s167
    %p169 = scmp.eq.s32.totalorder %s17, 0
    %p170 = por %p168, %p169
    %p171 = scmp.le.s32.totalorder 1, %s11
    %p172 = scmp.lt.s32.totalorder %s11, 3
    %p173 = pnand %p171, %p172
    %p174 = pneg %p173
    // Predicated region
    $region9: #{distributed_mlp_forward.1} parent=5 // pred_check
      _
    $region10: #{distributed_mlp_forward.1} parent=5 // pred_check_branch
      %176 = sbr.rel (%p173) target = $region12
    $region11: #{distributed_mlp_forward.1} parent=5 // pred_region
      %s177 = ssub.s32 %s11, 1
      // Predicated region
      $region13: #{distributed_mlp_forward.1} parent=11 // pred_check
        %p178 = pneg %p72
      $region14: #{distributed_mlp_forward.1} parent=11 // pred_check_branch
        %180 = sbr.rel (%p178) target = $region16
      $region15: #{distributed_mlp_forward.1} parent=11 // pred_region
        _
      $region16: #{distributed_mlp_forward.1} parent=11 // pred_fallthru
        _
      // Predicated region
      $region17: #{distributed_mlp_forward.1} parent=11 // pred_check
        %p181 = pneg %p93
      $region18: #{distributed_mlp_forward.1} parent=11 // pred_check_branch
        %183 = sbr.rel (%p181) target = $region20
      $region19: #{distributed_mlp_forward.1} parent=11 // pred_region
        _
      $region20: #{distributed_mlp_forward.1} parent=11 // pred_fallthru
        _
      // Predicated region
      $region21: #{distributed_mlp_forward.1} parent=11 // pred_check
        %p184 = pneg %p114
      $region22: #{distributed_mlp_forward.1} parent=11 // pred_check_branch
        %186 = sbr.rel (%p184) target = $region24
      $region23: #{distributed_mlp_forward.1} parent=11 // pred_region
        _
      $region24: #{distributed_mlp_forward.1} parent=11 // pred_fallthru
        _
      // Predicated region
      $region25: #{distributed_mlp_forward.1} parent=11 // pred_check
        %p187 = pneg %p135
      $region26: #{distributed_mlp_forward.1} parent=11 // pred_check_branch
        %189 = sbr.rel (%p187) target = $region28
      $region27: #{distributed_mlp_forward.1} parent=11 // pred_region
        _
      $region28: #{distributed_mlp_forward.1} parent=11 // pred_fallthru
        _
    $region12: #{distributed_mlp_forward.1} parent=5 // pred_fallthru
      _
    %p190 = scmp.lt.s32.totalorder %s11, 2
    // Predicated region
    $region29: #{distributed_mlp_forward.1} parent=5 // pred_check
      %p191 = pneg %p190
    $region30: #{distributed_mlp_forward.1} parent=5 // pred_check_branch
      %193 = sbr.rel (%p191) target = $region32
    $region31: #{distributed_mlp_forward.1} parent=5 // pred_region
      // Predicated region
      $region33: #{distributed_mlp_forward.1} parent=31 // pred_check
        %p194 = pneg %p45
      $region34: #{distributed_mlp_forward.1} parent=31 // pred_check_branch
        %196 = sbr.rel (%p194) target = $region36
      $region35: #{distributed_mlp_forward.1} parent=31 // pred_region
        %s197 = smul.u32 2, %s19
        %p198 = scmp.lt.s32.totalorder %s18, 1
        %s199 = scalar_select %p198, %s18, 1
        %p200 = scmp.lt.s32.totalorder %s197, 1
        %s201 = scalar_select %p200, %s197, 1
        %s202 = smul.addr %s199, 2
        %s203 = sadd.s32 %s201, %s202
        %s204 = smul.addr %s203, 4
        %s205 = scalar_lea.vmem %s0, %s204
        %s206 = smul.u32 2, %s19
      $region36: #{distributed_mlp_forward.1} parent=31 // pred_fallthru
        _
    $region32: #{distributed_mlp_forward.1} parent=5 // pred_fallthru
      _
    %p207 = scmp.le.s32.totalorder 1, %s11
    %p208 = scmp.lt.s32.totalorder %s11, 3
    %p209 = pnand %p207, %p208
    %p210 = pneg %p209
    // Predicated region
    $region37: #{distributed_mlp_forward.1} parent=5 // pred_check
      _
    $region38: #{distributed_mlp_forward.1} parent=5 // pred_check_branch
      %212 = sbr.rel (%p209) target = $region40
    $region39: #{distributed_mlp_forward.1} parent=5 // pred_region
      %s213 = ssub.s32 %s11, 1
      %s214 = smul.u32 2, %s21
      %p215 = scmp.lt.s32.totalorder %s20, 1
      %s216 = scalar_select %p215, %s20, 1
      %p217 = scmp.lt.s32.totalorder %s214, 1
      %s218 = scalar_select %p217, %s214, 1
      %s219 = smul.addr %s216, 2
      %s220 = sadd.s32 %s218, %s219
      %s221 = smul.addr %s220, 4
      %s222 = scalar_lea.vmem %s0, %s221
      %p223 = pneg %p51
      %p224 = pneg %p48
      %p225 = pneg %p72
      %p226 = pneg %p69
      %p227 = pneg %p93
      %p228 = pneg %p90
      %p229 = pneg %p114
      %p230 = pneg %p111
      %p231 = pneg %p135
      %p232 = pneg %p132
      %p233 = pneg %p163
      %p234 = pneg %p160
      %s235 = smul.u32 2, %s21
      %p236 = scmp.lt.s32.totalorder %s20, 1
      %s237 = scalar_select %p236, %s20, 1
      %p238 = scmp.lt.s32.totalorder %s235, 1
      %s239 = scalar_select %p238, %s235, 1
      %s240 = smul.addr %s237, 2
      %s241 = sadd.s32 %s239, %s240
      %s242 = smul.addr %s241, 4
      %s243 = scalar_lea.vmem %s5, %s242
      %s244 = smul.u32 2, %s21
      %p245 = scmp.lt.s32.totalorder %s20, 1
      %s246 = scalar_select %p245, %s20, 1
      %p247 = scmp.lt.s32.totalorder %s244, 1
      %s248 = scalar_select %p247, %s244, 1
      %s249 = smul.addr %s246, 2
      %s250 = sadd.s32 %s248, %s249
      %s251 = smul.addr %s250, 4
      %s252 = scalar_lea.vmem %s0, %s251
      %s253 = smul.u32 2, %s21
      %s254 = smul.u32 2, %s21
      %p255 = scmp.lt.s32.totalorder %s20, 1
      %s256 = scalar_select %p255, %s20, 1
      %p257 = scmp.lt.s32.totalorder %s254, 1
      %s258 = scalar_select %p257, %s254, 1
      %s259 = smul.addr %s256, 2
      %s260 = sadd.s32 %s258, %s259
      %s261 = smul.addr %s260, 4
      %s262 = scalar_lea.vmem %s5, %s261
      %s263 = smul.u32 2, %s21
      %v265 = vld [vmem:[%s252] sm:$0xff]
      %v267 = vcombine.high %v265, %v265
      %v269 = vpack.c.bf16 %v265, %v265
      %v270 = vpack.c.bf16 %v267, %v267
      %v271 = vld [vmem:[%s1] sm:$0xf]
      %v272 = vld [vmem:[%s1 + $0x4] sm:$0xf]
      %v273 = vld [vmem:[%s1 + $0x8] sm:$0xf]
      %v274 = vld [vmem:[%s1 + $0xc] sm:$0xf]
      %v275 = vld [vmem:[%s2] sm:$0xff]
      %v276 = vld [vmem:[%s2 + $0x8] sm:$0xff]
      %v277 = vld [vmem:[%s2 + $0x10] sm:$0xff]
      %v278 = vld [vmem:[%s2 + $0x18] sm:$0xff]
      %280 = vset.pattern.permute.xlu0 0
      %281 = vperm.xlu0 %280, %v275
      %v282 = vpop.permute.xlu0 %281
      %285 = vset.pattern.permute.xlu0 0
      %286 = vperm.xlu0 %285, %v276
      %v287 = vpop.permute.xlu0 %286
      %290 = vset.pattern.permute.xlu0 0
      %291 = vperm.xlu0 %290, %v277
      %v292 = vpop.permute.xlu0 %291
      %295 = vset.pattern.permute.xlu0 0
      %296 = vperm.xlu0 %295, %v278
      %v297 = vpop.permute.xlu0 %296
      %v303 = vunpack.c.l.b16 %v271
      %v304 = vunpack.c.l.b16 %v272
      %v305 = vunpack.c.l.b16 %v273
      %v306 = vunpack.c.l.b16 %v274
      %v307 = vpack.c.b16 %v304, %v303
      %v308 = vpack.c.b16 %v306, %v305
      %vm309 = vcmask 31744
      %v311 = vsel %vm309, %v307, 0
      %v314 = vsel %vm309, %v308, 0
      %vm316 = vcmask 1041408
      %v318 = vsel %vm316, %v269, 0
      %v321 = vsel %vm316, %v270, 0
      %323 = vmatprep.subr.bf16.mxu0 0
      %324 = vmatpush1.bf16.msra.mxu0 0
      %325 = vmatprep.subr.bf16.mxu0 0
      %326 = vmatpush1.bf16.msra.mxu0 0
      %327 = vmatprep.subr.bf16.mxu0 0
      %328 = vmatpush1.bf16.msra.mxu0 0
      %329 = vmatprep.subr.bf16.mxu0 0
      %330 = vmatpush1.bf16.msra.mxu0 0
      %331 = vmatprep.subr.bf16.mxu0 0
      %332 = vmatpush1.bf16.msra.mxu0 0
      %333 = vmatprep.subr.bf16.mxu0 0
      %334 = vmatpush1.bf16.msra.mxu0 0
      %335 = vmatprep.subr.bf16.mxu0 0
      %336 = vmatpush1.bf16.msra.mxu0 0
      %337 = vmatprep.subr.bf16.mxu0 %v321
      %338 = vmatpush1.bf16.msra.mxu0 %v318
      %339 = vmatprep.subr.bf16.mxu0 0
      %340 = vmatpush2.bf16.msra.mxu0 0
      %341 = vmatprep.subr.bf16.mxu0 0
      %342 = vmatpush2.bf16.msra.mxu0 0
      %343 = vmatprep.subr.bf16.mxu0 0
      %344 = vmatpush2.bf16.msra.mxu0 0
      %345 = vmatprep.subr.bf16.mxu0 0
      %346 = vmatpush2.bf16.msra.mxu0 0
      %347 = vmatprep.subr.bf16.mxu0 0
      %348 = vmatpush2.bf16.msra.mxu0 0
      %349 = vmatprep.subr.bf16.mxu0 0
      %350 = vmatpush2.bf16.msra.mxu0 0
      %351 = vmatprep.subr.bf16.mxu0 0
      %352 = vmatpush2.bf16.msra.mxu0 0
      %353 = vmatprep.subr.bf16.mxu0 0
      %354 = vmatpush2.bf16.msra.mxu0 0
      %355 = vmatprep.mubr.bf16.mxu0 0
      %356 = vmatmul.mubr.bf16.gmra.mxu0 %v311
      %v357 = vpop.f32.mrf.mxu0
      %v358 = vadd.f32 %v282, %v357
      %v359 = vpop.f32.mrf.mxu0
      %v360 = vadd.f32 %v282, %v359
      %v361 = vpop.f32.mrf.mxu0
      %v362 = vadd.f32 %v287, %v361
      %v363 = vpop.f32.mrf.mxu0
      %v364 = vadd.f32 %v287, %v363
      %365 = vmatprep.mubr.bf16.mxu0 0
      %366 = vmatmul.mubr.bf16.gmra.mxu0 %v314
      %v367 = vpop.f32.mrf.mxu0
      %v368 = vadd.f32 %v292, %v367
      %v369 = vpop.f32.mrf.mxu0
      %v370 = vadd.f32 %v292, %v369
      %v371 = vpop.f32.mrf.mxu0
      %v372 = vadd.f32 %v297, %v371
      %v373 = vpop.f32.mrf.mxu0
      %v374 = vadd.f32 %v297, %v373
      %375 = vdwg.mxu0
      %v376 = vmul.f32 %v358, 0.5
      %v377 = vmul.f32 %v360, 0.5
      %v378 = vmul.f32 %v362, 0.5
      %v379 = vmul.f32 %v364, 0.5
      %v380 = vmul.f32 %v368, 0.5
      %v381 = vmul.f32 %v370, 0.5
      %v382 = vmul.f32 %v372, 0.5
      %v383 = vmul.f32 %v374, 0.5
      %v384 = vmul.f32 %v358, 0.70710677
      %v385 = vmul.f32 %v360, 0.70710677
      %v386 = vmul.f32 %v362, 0.70710677
      %v387 = vmul.f32 %v364, 0.70710677
      %v388 = vmul.f32 %v368, 0.70710677
      %v389 = vmul.f32 %v370, 0.70710677
      %v390 = vmul.f32 %v372, 0.70710677
      %v391 = vmul.f32 %v374, 0.70710677
      %v392 = verf.f32.pop %v384
      %v393 = verf.f32.pop %v385
      %v394 = verf.f32.pop %v386
      %v395 = verf.f32.pop %v387
      %v396 = verf.f32.pop %v388
      %v397 = verf.f32.pop %v389
      %v398 = verf.f32.pop %v390
      %v399 = verf.f32.pop %v391
      %v400 = vadd.f32 %v392, 1.0
      %v401 = vadd.f32 %v393, 1.0
      %v402 = vadd.f32 %v394, 1.0
      %v403 = vadd.f32 %v395, 1.0
      %v404 = vadd.f32 %v396, 1.0
      %v405 = vadd.f32 %v397, 1.0
      %v406 = vadd.f32 %v398, 1.0
      %v407 = vadd.f32 %v399, 1.0
      %v408 = vmul.f32 %v376, %v400
      %v409 = vmul.f32 %v377, %v401
      %v410 = vmul.f32 %v378, %v402
      %v411 = vmul.f32 %v379, %v403
      %v412 = vmul.f32 %v380, %v404
      %v413 = vmul.f32 %v381, %v405
      %v414 = vmul.f32 %v382, %v406
      %v415 = vmul.f32 %v383, %v407
      %v416 = vld [vmem:[%s3] sm:$0x3]
      %v417 = vpack.c.bf16 %v410, %v408
      %v418 = vpack.c.bf16 %v411, %v409
      %v419 = vpack.c.bf16 %v414, %v412
      %v420 = vpack.c.bf16 %v415, %v413
      %v421 = vld [vmem:[%s4] sm:$0xf]
      %423 = vset.pattern.permute.xlu0 0
      %424 = vperm.xlu0 %423, %v421
      %v425 = vpop.permute.xlu0 %424
      %vm427 = vcmask 261120
      %v429 = vsel %vm427, %v416, 0
      %431 = vmatprep.subr.bf16.mxu0 0
      %432 = vmatpush1.bf16.msra.mxu0 0
      %433 = vmatprep.subr.bf16.mxu0 0
      %434 = vmatpush1.bf16.msra.mxu0 0
      %435 = vmatprep.subr.bf16.mxu0 0
      %436 = vmatpush1.bf16.msra.mxu0 0
      %437 = vmatprep.subr.bf16.mxu0 0
      %438 = vmatpush1.bf16.msra.mxu0 0
      %439 = vmatprep.subr.bf16.mxu0 0
      %440 = vmatpush1.bf16.msra.mxu0 0
      %441 = vmatprep.subr.bf16.mxu0 0
      %442 = vmatpush1.bf16.msra.mxu0 0
      %443 = vmatprep.subr.bf16.mxu0 %v420
      %444 = vmatpush1.bf16.msra.mxu0 %v419
      %445 = vmatprep.subr.bf16.mxu0 %v418
      %446 = vmatpush1.bf16.msra.mxu0 %v417
      %447 = vmatprep.subr.bf16.mxu0 0
      %448 = vmatpush2.bf16.msra.mxu0 0
      %449 = vmatprep.subr.bf16.mxu0 0
      %450 = vmatpush2.bf16.msra.mxu0 0
      %451 = vmatprep.subr.bf16.mxu0 0
      %452 = vmatpush2.bf16.msra.mxu0 0
      %453 = vmatprep.subr.bf16.mxu0 0
      %454 = vmatpush2.bf16.msra.mxu0 0
      %455 = vmatprep.subr.bf16.mxu0 0
      %456 = vmatpush2.bf16.msra.mxu0 0
      %457 = vmatprep.subr.bf16.mxu0 0
      %458 = vmatpush2.bf16.msra.mxu0 0
      %459 = vmatprep.subr.bf16.mxu0 0
      %460 = vmatpush2.bf16.msra.mxu0 0
      %461 = vmatprep.subr.bf16.mxu0 0
      %462 = vmatpush2.bf16.msra.mxu0 0
      %463 = vmatprep.mubr.bf16.mxu0 0
      %464 = vmatmul.mubr.bf16.gmra.mxu0 %v429
      %v465 = vpop.f32.mrf.mxu0
      %v466 = vadd.f32 %v425, %v465
      %v467 = vpop.f32.mrf.mxu0
      %v468 = vadd.f32 %v425, %v467
      %v469 = vpop.f32.mrf.mxu0
      %v470 = vpop.f32.mrf.mxu0
      %471 = vdwg.mxu0
      %v474 = vcombine.low %v466, %v468
      %476 = vst [vmem:[%s262] sm:$0xff] %v474
      %s477 = smul.u32 2, %s21
      %p478 = scmp.lt.s32.totalorder %s20, 1
      %s479 = scalar_select %p478, %s20, 1
      %p480 = scmp.lt.s32.totalorder %s477, 1
      %s481 = scalar_select %p480, %s477, 1
      %s482 = smul.addr %s479, 2
      %s483 = sadd.s32 %s481, %s482
      %s484 = smul.addr %s483, 4
      %s485 = scalar_lea.vmem %s5, %s484
      // Predicated region
      $region41: #{distributed_mlp_forward.1} parent=39 // pred_check
        %p486 = pneg %p160
      $region42: #{distributed_mlp_forward.1} parent=39 // pred_check_branch
        %488 = sbr.rel (%p486) target = $region44
      $region43: #{distributed_mlp_forward.1} parent=39 // pred_region
        %s489 = smul.u32 2, %s21
      $region44: #{distributed_mlp_forward.1} parent=39 // pred_fallthru
        _
    $region40: #{distributed_mlp_forward.1} parent=5 // pred_fallthru
      _
    %p490 = scmp.le.s32.totalorder 2, %s11
    // Predicated region
    $region45: #{distributed_mlp_forward.1} parent=5 // pred_check
      %p491 = pneg %p490
    $region46: #{distributed_mlp_forward.1} parent=5 // pred_check_branch
      %493 = sbr.rel (%p491) target = $region48
    $region47: #{distributed_mlp_forward.1} parent=5 // pred_region
      %s494 = ssub.s32 %s11, 2
      // Predicated region
      $region49: #{distributed_mlp_forward.1} parent=47 // pred_check
        %p495 = pneg %p166
      $region50: #{distributed_mlp_forward.1} parent=47 // pred_check_branch
        %497 = sbr.rel (%p495) target = $region52
      $region51: #{distributed_mlp_forward.1} parent=47 // pred_region
        %s498 = smul.u32 2, %s23
        %p499 = scmp.lt.s32.totalorder %s22, 1
        %s500 = scalar_select %p499, %s22, 1
        %p501 = scmp.lt.s32.totalorder %s498, 1
        %s502 = scalar_select %p501, %s498, 1
        %s503 = smul.addr %s500, 2
        %s504 = sadd.s32 %s502, %s503
        %s505 = smul.addr %s504, 4
        %s506 = scalar_lea.vmem %s5, %s505
      $region52: #{distributed_mlp_forward.1} parent=47 // pred_fallthru
        _
    $region48: #{distributed_mlp_forward.1} parent=5 // pred_fallthru
      _
  $region6: #{distributed_mlp_forward.1} parent=0 // loop_footer
    %s15 = sadd.s32 1, %s11
  $region7: #{distributed_mlp_forward.1} parent=0 // loop_footer_branch
    %10 = sbr.rel target = $region3
  $region8: #{distributed_mlp_forward.1} parent=0 // loop_exit
    _

</llo_original>
